<compile_context>
chip_gen: v5e
topology: v5e:2x2
jax: 0.10.0
libtpu: 0.0.40
codegen_flags: <defaults>
</compile_context>

<pallas_src>
import functools

import jax
import jax.numpy as jnp
from jax.experimental import pallas as pl
from jax.experimental.pallas import tpu as pltpu


def _mha_kernel(q_ref, k_ref, v_ref, wq_ref, wk_ref, wv_ref, wo_ref,
                out_ref, ctx_ref, *, num_heads: int, head_dim: int):
    """One batch element per grid step.

    Ref shapes (leading batch block of 1):
      q_ref/k_ref/v_ref : (1, S, E)  f32
      wq_ref            : (E, Hq*D)  bf16
      wk_ref/wv_ref     : (E, Hkv*D) bf16
      wo_ref            : (Hkv*D, E) bf16
      out_ref           : (1, S, E)  f32
      ctx_ref           : (1, Hq, S, S) f32
    """
    # bf16 operands for the MXU; accumulation stays f32.
    q = q_ref[0].astype(jnp.bfloat16)          # (S, E)
    k = k_ref[0].astype(jnp.bfloat16)
    v = v_ref[0].astype(jnp.bfloat16)

    qp = jnp.dot(q, wq_ref[...], preferred_element_type=jnp.float32)   # (S, Hq*D) f32
    kp = jnp.dot(k, wk_ref[...], preferred_element_type=jnp.float32)   # (S, Hkv*D) f32
    vp = jnp.dot(v, wv_ref[...], preferred_element_type=jnp.float32)   # (S, Hkv*D) f32

    # Fold 1/sqrt(D) into q once (O(S*H*D)) instead of scaling (S,S) scores.
    scale = jnp.float32(1.0) / jnp.sqrt(jnp.float32(head_dim))
    qs = (qp * scale).astype(jnp.bfloat16)      # (S, H*D) bf16
    ks = kp.astype(jnp.bfloat16)
    vs = vp.astype(jnp.bfloat16)

    head_outs = []
    # Statically unrolled per-head attention (H is small at these shapes).
    for h in range(num_heads):
        lo = h * head_dim
        hi = lo + head_dim
        qh = qs[:, lo:hi]                                   # (S, D) bf16
        kh = ks[:, lo:hi]                                   # (S, D) bf16
        vh = vs[:, lo:hi]                                   # (S, D) bf16

        # scores = (qh / sqrt(D)) @ kh^T, f32 accumulation on the MXU.
        scores = jax.lax.dot_general(
            qh, kh, (((1,), (1,)), ((), ())),
            preferred_element_type=jnp.float32)             # (S, S) f32

        # softmax over keys (torch nn.Softmax(dim=3)), f32 math;
        # divide goes to the EUP via approximate reciprocal.
        m = jnp.max(scores, axis=-1, keepdims=True)
        e = jnp.exp(scores - m)
        inv_denom = pl.reciprocal(jnp.sum(e, axis=-1, keepdims=True), approx=True)
        probs = e * inv_denom                               # (S, S) f32

        ctx_ref[0, h] = probs.astype(ctx_ref.dtype)

        head_outs.append(
            jnp.dot(probs.astype(jnp.bfloat16), vh,
                    preferred_element_type=jnp.float32))    # (S, D) f32

    # Single large-K output projection: (S, H*D) @ (H*D, E).
    o_all = jnp.concatenate(head_outs, axis=1).astype(jnp.bfloat16)     # (S, H*D)
    out = jnp.dot(o_all, wo_ref[...], preferred_element_type=jnp.float32)
    out_ref[0] = out.astype(out_ref.dtype)


def multi_head_attention(query, key, value, wq, wk, wv, wo,
                         *, num_heads: int, head_dim: int):
    """query/key/value: (B, S, E) f32.  wq:(E, Hq*D) wk/wv:(E, Hkv*D) wo:(KV, E)."""
    b, s, e = query.shape
    qd = wq.shape[1]
    kvd = wk.shape[1]
    # TODO(synk): GQA (Hq != Hkv) not supported, mirroring the module's TODO.
    assert qd == kvd, "num_query_heads must equal num_key_value_heads"

    # bf16 weights: MXU-native operand dtype; accumulation stays f32 in-kernel.
    wq_b = wq.astype(jnp.bfloat16)
    wk_b = wk.astype(jnp.bfloat16)
    wv_b = wv.astype(jnp.bfloat16)
    wo_b = wo.astype(jnp.bfloat16)

    kernel = functools.partial(_mha_kernel, num_heads=num_heads, head_dim=head_dim)

    out_shapes = (
        jax.ShapeDtypeStruct((b, s, e), query.dtype),                 # x
        jax.ShapeDtypeStruct((b, num_heads, s, s), jnp.float32),      # context
    )

    grid_spec = pltpu.PrefetchScalarGridSpec(
        num_scalar_prefetch=0,
        grid=(b,),
        in_specs=[
            pl.BlockSpec((1, s, e), lambda i: (i, 0, 0)),   # query
            pl.BlockSpec((1, s, e), lambda i: (i, 0, 0)),   # key
            pl.BlockSpec((1, s, e), lambda i: (i, 0, 0)),   # value
            pl.BlockSpec((e, qd), lambda i: (0, 0)),        # wq (constant)
            pl.BlockSpec((e, kvd), lambda i: (0, 0)),       # wk (constant)
            pl.BlockSpec((e, kvd), lambda i: (0, 0)),       # wv (constant)
            pl.BlockSpec((kvd, e), lambda i: (0, 0)),       # wo (constant)
        ],
        out_specs=[
            pl.BlockSpec((1, s, e), lambda i: (i, 0, 0)),
            pl.BlockSpec((1, num_heads, s, s), lambda i: (i, 0, 0, 0)),
        ],
    )

    return pl.pallas_call(
        kernel,
        out_shape=out_shapes,
        grid_spec=grid_spec,
        compiler_params=pltpu.CompilerParams(
            dimension_semantics=("parallel",)),
    )(query, key, value, wq_b, wk_b, wv_b, wo_b)


def _reference(query, key, value, wq, wk, wv, wo, *, num_heads, head_dim):
    """Pure-JAX f32 reference mirroring the PyTorch forward."""
    b, s, e = query.shape
    qp = (query @ wq).reshape(b, s, num_heads, head_dim).transpose(0, 2, 1, 3)
    kp = (key @ wk).reshape(b, s, num_heads, head_dim).transpose(0, 2, 1, 3)
    vp = (value @ wv).reshape(b, s, num_heads, head_dim).transpose(0, 2, 1, 3)
    scores = jnp.einsum("bhqd,bhkd->bhqk", qp, kp) / jnp.sqrt(jnp.float32(head_dim))
    context = jax.nn.softmax(scores, axis=-1)
    x = jnp.einsum("bhqk,bhkd->bhqd", context, vp)
    x = x.transpose(0, 2, 1, 3).reshape(b, s, num_heads * head_dim)
    x = x @ wo
    return x, context


if __name__ == "__main__":
    # Small shapes consistent with the module:
    #   embedding_dim=32, attn_head_dim=8, num_query_heads=num_key_value_heads=4
    B, S, E = 2, 8, 32
    H, D = 4, 8
    QD = H * D       # query_dim
    KVD = H * D      # key_value_dim

    key0 = jax.random.PRNGKey(0)
    kq, kk, kv, kwq, kwk, kwv, kwo = jax.random.split(key0, 7)

    query = jax.random.normal(kq, (B, S, E), dtype=jnp.float32)
    key_in = jax.random.normal(kk, (B, S, E), dtype=jnp.float32)
    value = jax.random.normal(kv, (B, S, E), dtype=jnp.float32)

    # Deterministic "Linear" weights, stored as (in_dim, out_dim) = W.T.
    wq = jax.random.normal(kwq, (E, QD), dtype=jnp.float32) * 0.1
    wk = jax.random.normal(kwk, (E, KVD), dtype=jnp.float32) * 0.1
    wv = jax.random.normal(kwv, (E, KVD), dtype=jnp.float32) * 0.1
    wo = jax.random.normal(kwo, (KVD, E), dtype=jnp.float32) * 0.1

    x_out, ctx_out = multi_head_attention(
        query, key_in, value, wq, wk, wv, wo, num_heads=H, head_dim=D)
    jax.block_until_ready((x_out, ctx_out))

    x_ref, ctx_ref = _reference(
        query, key_in, value, wq, wk, wv, wo, num_heads=H, head_dim=D)

    assert x_out.shape == (B, S, E)
    assert ctx_out.shape == (B, H, S, S)
    # Tolerances account for bf16 MXU operands (f32 accumulation) and the
    # approximate EUP reciprocal in the softmax vs. the pure-f32 reference.
    assert jnp.allclose(x_out, x_ref, atol=5e-2, rtol=5e-2), (
        float(jnp.max(jnp.abs(x_out - x_ref))))
    assert jnp.allclose(ctx_out, ctx_ref, atol=2e-2), (
        float(jnp.max(jnp.abs(ctx_out - ctx_ref))))

    print("KERNEL_OK")
</pallas_src>

<mosaic_0001>
module attributes {stable_mosaic.version = 11 : i64} {
  func.func @_mha_kernel(%arg0: i32, %arg1: memref<1x8x32xf32, #tpu.memory_space<vmem>>, %arg2: memref<1x8x32xf32, #tpu.memory_space<vmem>>, %arg3: memref<1x8x32xf32, #tpu.memory_space<vmem>>, %arg4: memref<32x32xbf16, #tpu.memory_space<vmem>>, %arg5: memref<32x32xbf16, #tpu.memory_space<vmem>>, %arg6: memref<32x32xbf16, #tpu.memory_space<vmem>>, %arg7: memref<32x32xbf16, #tpu.memory_space<vmem>>, %arg8: memref<1x8x32xf32, #tpu.memory_space<vmem>>, %arg9: memref<1x4x8x8xf32, #tpu.memory_space<vmem>>) attributes {dimension_semantics = [#tpu.dimension_semantics<parallel>], iteration_bounds = array<i64: 2>, scalar_prefetch = 0 : i64, scratch_operands = 0 : i64, tpu.core_type = #tpu.core_type<tc>, window_params = [{transform_indices = @transform_0, window_bounds = array<i64: 1, 8, 32>}, {transform_indices = @transform_1, window_bounds = array<i64: 1, 8, 32>}, {transform_indices = @transform_2, window_bounds = array<i64: 1, 8, 32>}, {pipeline_mode = #tpu.pipeline_mode<synchronous>, transform_indices = @transform_3, window_bounds = array<i64: 32, 32>}, {pipeline_mode = #tpu.pipeline_mode<synchronous>, transform_indices = @transform_4, window_bounds = array<i64: 32, 32>}, {pipeline_mode = #tpu.pipeline_mode<synchronous>, transform_indices = @transform_5, window_bounds = array<i64: 32, 32>}, {pipeline_mode = #tpu.pipeline_mode<synchronous>, transform_indices = @transform_6, window_bounds = array<i64: 32, 32>}, {transform_indices = @transform_7, window_bounds = array<i64: 1, 8, 32>}, {transform_indices = @transform_8, window_bounds = array<i64: 1, 4, 8, 8>}]} {
    %c0 = arith.constant 0 : index
    %c0_0 = arith.constant 0 : index
    %c0_1 = arith.constant 0 : index
    %0 = vector.load %arg1[%c0, %c0_0, %c0_1] : memref<1x8x32xf32, #tpu.memory_space<vmem>>, vector<1x8x32xf32>
    %1 = vector.shape_cast %0 : vector<1x8x32xf32> to vector<8x32xf32>
    %2 = arith.truncf %1 : vector<8x32xf32> to vector<8x32xbf16>
    %c0_2 = arith.constant 0 : index
    %c0_3 = arith.constant 0 : index
    %c0_4 = arith.constant 0 : index
    %3 = vector.load %arg2[%c0_2, %c0_3, %c0_4] : memref<1x8x32xf32, #tpu.memory_space<vmem>>, vector<1x8x32xf32>
    %4 = vector.shape_cast %3 : vector<1x8x32xf32> to vector<8x32xf32>
    %5 = arith.truncf %4 : vector<8x32xf32> to vector<8x32xbf16>
    %c0_5 = arith.constant 0 : index
    %c0_6 = arith.constant 0 : index
    %c0_7 = arith.constant 0 : index
    %6 = vector.load %arg3[%c0_5, %c0_6, %c0_7] : memref<1x8x32xf32, #tpu.memory_space<vmem>>, vector<1x8x32xf32>
    %7 = vector.shape_cast %6 : vector<1x8x32xf32> to vector<8x32xf32>
    %8 = arith.truncf %7 : vector<8x32xf32> to vector<8x32xbf16>
    %c0_8 = arith.constant 0 : index
    %c0_9 = arith.constant 0 : index
    %9 = vector.load %arg4[%c0_8, %c0_9] : memref<32x32xbf16, #tpu.memory_space<vmem>>, vector<32x32xbf16>
    %cst = arith.constant dense<0.000000e+00> : vector<8x32xf32>
    %10 = tpu.matmul %2, %9, %cst {dimension_numbers = #tpu.dot_dimension_numbers<[1], [0], [0], [1], [0, 0, 1, 1], [], []>} : vector<8x32xbf16>, vector<32x32xbf16>, vector<8x32xf32> -> vector<8x32xf32>
    %c0_10 = arith.constant 0 : index
    %c0_11 = arith.constant 0 : index
    %11 = vector.load %arg5[%c0_10, %c0_11] : memref<32x32xbf16, #tpu.memory_space<vmem>>, vector<32x32xbf16>
    %cst_12 = arith.constant dense<0.000000e+00> : vector<8x32xf32>
    %12 = tpu.matmul %5, %11, %cst_12 {dimension_numbers = #tpu.dot_dimension_numbers<[1], [0], [0], [1], [0, 0, 1, 1], [], []>} : vector<8x32xbf16>, vector<32x32xbf16>, vector<8x32xf32> -> vector<8x32xf32>
    %c0_13 = arith.constant 0 : index
    %c0_14 = arith.constant 0 : index
    %13 = vector.load %arg6[%c0_13, %c0_14] : memref<32x32xbf16, #tpu.memory_space<vmem>>, vector<32x32xbf16>
    %cst_15 = arith.constant dense<0.000000e+00> : vector<8x32xf32>
    %14 = tpu.matmul %8, %13, %cst_15 {dimension_numbers = #tpu.dot_dimension_numbers<[1], [0], [0], [1], [0, 0, 1, 1], [], []>} : vector<8x32xbf16>, vector<32x32xbf16>, vector<8x32xf32> -> vector<8x32xf32>
    %cst_16 = arith.constant 8.000000e+00 : f32
    %15 = math.sqrt %cst_16 : f32
    %cst_17 = arith.constant 1.000000e+00 : f32
    %16 = arith.divf %cst_17, %15 : f32
    %17 = vector.broadcast %16 : f32 to vector<8x32xf32>
    %18 = arith.mulf %10, %17 : vector<8x32xf32>
    %19 = arith.truncf %18 : vector<8x32xf32> to vector<8x32xbf16>
    %20 = arith.truncf %12 : vector<8x32xf32> to vector<8x32xbf16>
    %21 = arith.truncf %14 : vector<8x32xf32> to vector<8x32xbf16>
    %22 = vector.extract_strided_slice %19 {offsets = [0, 0], sizes = [8, 8], strides = [1, 1]} : vector<8x32xbf16> to vector<8x8xbf16>
    %23 = vector.extract_strided_slice %20 {offsets = [0, 0], sizes = [8, 8], strides = [1, 1]} : vector<8x32xbf16> to vector<8x8xbf16>
    %24 = vector.extract_strided_slice %21 {offsets = [0, 0], sizes = [8, 8], strides = [1, 1]} : vector<8x32xbf16> to vector<8x8xbf16>
    %cst_18 = arith.constant dense<0.000000e+00> : vector<8x8xf32>
    %25 = tpu.matmul %22, %23, %cst_18 {dimension_numbers = #tpu.dot_dimension_numbers<[1], [1], [0], [0], [0, 0, 1, 0], [], []>} : vector<8x8xbf16>, vector<8x8xbf16>, vector<8x8xf32> -> vector<8x8xf32>
    %cst_19 = arith.constant dense<0xFF800000> : vector<8xf32>
    %26 = vector.multi_reduction <maximumf>, %25, %cst_19 [1] : vector<8x8xf32> to vector<8xf32>
    %27 = vector.shape_cast %26 : vector<8xf32> to vector<8x1xf32>
    %28 = vector.broadcast %27 : vector<8x1xf32> to vector<8x8xf32>
    %29 = arith.subf %25, %28 : vector<8x8xf32>
    %30 = math.exp %29 : vector<8x8xf32>
    %cst_20 = arith.constant dense<0.000000e+00> : vector<8xf32>
    %31 = vector.multi_reduction <add>, %30, %cst_20 [1] : vector<8x8xf32> to vector<8xf32>
    %32 = vector.shape_cast %31 : vector<8xf32> to vector<8x1xf32>
    %33 = tpu.reciprocal %32 {approx = true} : vector<8x1xf32> -> vector<8x1xf32>
    %34 = vector.broadcast %33 : vector<8x1xf32> to vector<8x8xf32>
    %35 = arith.mulf %30, %34 : vector<8x8xf32>
    %c0_21 = arith.constant 0 : index
    %c0_22 = arith.constant 0 : index
    %c0_23 = arith.constant 0 : index
    %c0_24 = arith.constant 0 : index
    %36 = vector.load %arg9[%c0_21, %c0_22, %c0_23, %c0_24] : memref<1x4x8x8xf32, #tpu.memory_space<vmem>>, vector<1x1x8x8xf32>
    %37 = vector.shape_cast %36 : vector<1x1x8x8xf32> to vector<8x8xf32>
    %38 = vector.shape_cast %35 : vector<8x8xf32> to vector<1x1x8x8xf32>
    tpu.vector_store %arg9[%c0_21, %c0_22, %c0_23, %c0_24], %38 {strides = array<i32>} : memref<1x4x8x8xf32, #tpu.memory_space<vmem>>, vector<1x1x8x8xf32>,
    %39 = arith.truncf %35 : vector<8x8xf32> to vector<8x8xbf16>
    %cst_25 = arith.constant dense<0.000000e+00> : vector<8x8xf32>
    %40 = tpu.matmul %39, %24, %cst_25 {dimension_numbers = #tpu.dot_dimension_numbers<[1], [0], [0], [1], [0, 0, 1, 1], [], []>} : vector<8x8xbf16>, vector<8x8xbf16>, vector<8x8xf32> -> vector<8x8xf32>
    %41 = vector.extract_strided_slice %19 {offsets = [0, 8], sizes = [8, 8], strides = [1, 1]} : vector<8x32xbf16> to vector<8x8xbf16>
    %42 = vector.extract_strided_slice %20 {offsets = [0, 8], sizes = [8, 8], strides = [1, 1]} : vector<8x32xbf16> to vector<8x8xbf16>
    %43 = vector.extract_strided_slice %21 {offsets = [0, 8], sizes = [8, 8], strides = [1, 1]} : vector<8x32xbf16> to vector<8x8xbf16>
    %cst_26 = arith.constant dense<0.000000e+00> : vector<8x8xf32>
    %44 = tpu.matmul %41, %42, %cst_26 {dimension_numbers = #tpu.dot_dimension_numbers<[1], [1], [0], [0], [0, 0, 1, 0], [], []>} : vector<8x8xbf16>, vector<8x8xbf16>, vector<8x8xf32> -> vector<8x8xf32>
    %cst_27 = arith.constant dense<0xFF800000> : vector<8xf32>
    %45 = vector.multi_reduction <maximumf>, %44, %cst_27 [1] : vector<8x8xf32> to vector<8xf32>
    %46 = vector.shape_cast %45 : vector<8xf32> to vector<8x1xf32>
    %47 = vector.broadcast %46 : vector<8x1xf32> to vector<8x8xf32>
    %48 = arith.subf %44, %47 : vector<8x8xf32>
    %49 = math.exp %48 : vector<8x8xf32>
    %cst_28 = arith.constant dense<0.000000e+00> : vector<8xf32>
    %50 = vector.multi_reduction <add>, %49, %cst_28 [1] : vector<8x8xf32> to vector<8xf32>
    %51 = vector.shape_cast %50 : vector<8xf32> to vector<8x1xf32>
    %52 = tpu.reciprocal %51 {approx = true} : vector<8x1xf32> -> vector<8x1xf32>
    %53 = vector.broadcast %52 : vector<8x1xf32> to vector<8x8xf32>
    %54 = arith.mulf %49, %53 : vector<8x8xf32>
    %c0_29 = arith.constant 0 : index
    %c1 = arith.constant 1 : index
    %c0_30 = arith.constant 0 : index
    %c0_31 = arith.constant 0 : index
    %55 = vector.load %arg9[%c0_29, %c1, %c0_30, %c0_31] : memref<1x4x8x8xf32, #tpu.memory_space<vmem>>, vector<1x1x8x8xf32>
    %56 = vector.shape_cast %55 : vector<1x1x8x8xf32> to vector<8x8xf32>
    %57 = vector.shape_cast %54 : vector<8x8xf32> to vector<1x1x8x8xf32>
    tpu.vector_store %arg9[%c0_29, %c1, %c0_30, %c0_31], %57 {strides = array<i32>} : memref<1x4x8x8xf32, #tpu.memory_space<vmem>>, vector<1x1x8x8xf32>,
    %58 = arith.truncf %54 : vector<8x8xf32> to vector<8x8xbf16>
    %cst_32 = arith.constant dense<0.000000e+00> : vector<8x8xf32>
    %59 = tpu.matmul %58, %43, %cst_32 {dimension_numbers = #tpu.dot_dimension_numbers<[1], [0], [0], [1], [0, 0, 1, 1], [], []>} : vector<8x8xbf16>, vector<8x8xbf16>, vector<8x8xf32> -> vector<8x8xf32>
    %60 = vector.extract_strided_slice %19 {offsets = [0, 16], sizes = [8, 8], strides = [1, 1]} : vector<8x32xbf16> to vector<8x8xbf16>
    %61 = vector.extract_strided_slice %20 {offsets = [0, 16], sizes = [8, 8], strides = [1, 1]} : vector<8x32xbf16> to vector<8x8xbf16>
    %62 = vector.extract_strided_slice %21 {offsets = [0, 16], sizes = [8, 8], strides = [1, 1]} : vector<8x32xbf16> to vector<8x8xbf16>
    %cst_33 = arith.constant dense<0.000000e+00> : vector<8x8xf32>
    %63 = tpu.matmul %60, %61, %cst_33 {dimension_numbers = #tpu.dot_dimension_numbers<[1], [1], [0], [0], [0, 0, 1, 0], [], []>} : vector<8x8xbf16>, vector<8x8xbf16>, vector<8x8xf32> -> vector<8x8xf32>
    %cst_34 = arith.constant dense<0xFF800000> : vector<8xf32>
    %64 = vector.multi_reduction <maximumf>, %63, %cst_34 [1] : vector<8x8xf32> to vector<8xf32>
    %65 = vector.shape_cast %64 : vector<8xf32> to vector<8x1xf32>
    %66 = vector.broadcast %65 : vector<8x1xf32> to vector<8x8xf32>
    %67 = arith.subf %63, %66 : vector<8x8xf32>
    %68 = math.exp %67 : vector<8x8xf32>
    %cst_35 = arith.constant dense<0.000000e+00> : vector<8xf32>
    %69 = vector.multi_reduction <add>, %68, %cst_35 [1] : vector<8x8xf32> to vector<8xf32>
    %70 = vector.shape_cast %69 : vector<8xf32> to vector<8x1xf32>
    %71 = tpu.reciprocal %70 {approx = true} : vector<8x1xf32> -> vector<8x1xf32>
    %72 = vector.broadcast %71 : vector<8x1xf32> to vector<8x8xf32>
    %73 = arith.mulf %68, %72 : vector<8x8xf32>
    %c0_36 = arith.constant 0 : index
    %c2 = arith.constant 2 : index
    %c0_37 = arith.constant 0 : index
    %c0_38 = arith.constant 0 : index
    %74 = vector.load %arg9[%c0_36, %c2, %c0_37, %c0_38] : memref<1x4x8x8xf32, #tpu.memory_space<vmem>>, vector<1x1x8x8xf32>
    %75 = vector.shape_cast %74 : vector<1x1x8x8xf32> to vector<8x8xf32>
    %76 = vector.shape_cast %73 : vector<8x8xf32> to vector<1x1x8x8xf32>
    tpu.vector_store %arg9[%c0_36, %c2, %c0_37, %c0_38], %76 {strides = array<i32>} : memref<1x4x8x8xf32, #tpu.memory_space<vmem>>, vector<1x1x8x8xf32>,
    %77 = arith.truncf %73 : vector<8x8xf32> to vector<8x8xbf16>
    %cst_39 = arith.constant dense<0.000000e+00> : vector<8x8xf32>
    %78 = tpu.matmul %77, %62, %cst_39 {dimension_numbers = #tpu.dot_dimension_numbers<[1], [0], [0], [1], [0, 0, 1, 1], [], []>} : vector<8x8xbf16>, vector<8x8xbf16>, vector<8x8xf32> -> vector<8x8xf32>
    %79 = vector.extract_strided_slice %19 {offsets = [0, 24], sizes = [8, 8], strides = [1, 1]} : vector<8x32xbf16> to vector<8x8xbf16>
    %80 = vector.extract_strided_slice %20 {offsets = [0, 24], sizes = [8, 8], strides = [1, 1]} : vector<8x32xbf16> to vector<8x8xbf16>
    %81 = vector.extract_strided_slice %21 {offsets = [0, 24], sizes = [8, 8], strides = [1, 1]} : vector<8x32xbf16> to vector<8x8xbf16>
    %cst_40 = arith.constant dense<0.000000e+00> : vector<8x8xf32>
    %82 = tpu.matmul %79, %80, %cst_40 {dimension_numbers = #tpu.dot_dimension_numbers<[1], [1], [0], [0], [0, 0, 1, 0], [], []>} : vector<8x8xbf16>, vector<8x8xbf16>, vector<8x8xf32> -> vector<8x8xf32>
    %cst_41 = arith.constant dense<0xFF800000> : vector<8xf32>
    %83 = vector.multi_reduction <maximumf>, %82, %cst_41 [1] : vector<8x8xf32> to vector<8xf32>
    %84 = vector.shape_cast %83 : vector<8xf32> to vector<8x1xf32>
    %85 = vector.broadcast %84 : vector<8x1xf32> to vector<8x8xf32>
    %86 = arith.subf %82, %85 : vector<8x8xf32>
    %87 = math.exp %86 : vector<8x8xf32>
    %cst_42 = arith.constant dense<0.000000e+00> : vector<8xf32>
    %88 = vector.multi_reduction <add>, %87, %cst_42 [1] : vector<8x8xf32> to vector<8xf32>
    %89 = vector.shape_cast %88 : vector<8xf32> to vector<8x1xf32>
    %90 = tpu.reciprocal %89 {approx = true} : vector<8x1xf32> -> vector<8x1xf32>
    %91 = vector.broadcast %90 : vector<8x1xf32> to vector<8x8xf32>
    %92 = arith.mulf %87, %91 : vector<8x8xf32>
    %c0_43 = arith.constant 0 : index
    %c3 = arith.constant 3 : index
    %c0_44 = arith.constant 0 : index
    %c0_45 = arith.constant 0 : index
    %93 = vector.load %arg9[%c0_43, %c3, %c0_44, %c0_45] : memref<1x4x8x8xf32, #tpu.memory_space<vmem>>, vector<1x1x8x8xf32>
    %94 = vector.shape_cast %93 : vector<1x1x8x8xf32> to vector<8x8xf32>
    %95 = vector.shape_cast %92 : vector<8x8xf32> to vector<1x1x8x8xf32>
    tpu.vector_store %arg9[%c0_43, %c3, %c0_44, %c0_45], %95 {strides = array<i32>} : memref<1x4x8x8xf32, #tpu.memory_space<vmem>>, vector<1x1x8x8xf32>,
    %96 = arith.truncf %92 : vector<8x8xf32> to vector<8x8xbf16>
    %cst_46 = arith.constant dense<0.000000e+00> : vector<8x8xf32>
    %97 = tpu.matmul %96, %81, %cst_46 {dimension_numbers = #tpu.dot_dimension_numbers<[1], [0], [0], [1], [0, 0, 1, 1], [], []>} : vector<8x8xbf16>, vector<8x8xbf16>, vector<8x8xf32> -> vector<8x8xf32>
    %98 = tpu.concatenate %40, %59, %78, %97 in 1 : vector<8x8xf32>, vector<8x8xf32>, vector<8x8xf32>, vector<8x8xf32> -> vector<8x32xf32>
    %99 = arith.truncf %98 : vector<8x32xf32> to vector<8x32xbf16>
    %c0_47 = arith.constant 0 : index
    %c0_48 = arith.constant 0 : index
    %100 = vector.load %arg7[%c0_47, %c0_48] : memref<32x32xbf16, #tpu.memory_space<vmem>>, vector<32x32xbf16>
    %cst_49 = arith.constant dense<0.000000e+00> : vector<8x32xf32>
    %101 = tpu.matmul %99, %100, %cst_49 {dimension_numbers = #tpu.dot_dimension_numbers<[1], [0], [0], [1], [0, 0, 1, 1], [], []>} : vector<8x32xbf16>, vector<32x32xbf16>, vector<8x32xf32> -> vector<8x32xf32>
    %c0_50 = arith.constant 0 : index
    %c0_51 = arith.constant 0 : index
    %c0_52 = arith.constant 0 : index
    %102 = vector.load %arg8[%c0_50, %c0_51, %c0_52] : memref<1x8x32xf32, #tpu.memory_space<vmem>>, vector<1x8x32xf32>
    %103 = vector.shape_cast %102 : vector<1x8x32xf32> to vector<8x32xf32>
    %104 = vector.shape_cast %101 : vector<8x32xf32> to vector<1x8x32xf32>
    tpu.vector_store %arg8[%c0_50, %c0_51, %c0_52], %104 {strides = array<i32>} : memref<1x8x32xf32, #tpu.memory_space<vmem>>, vector<1x8x32xf32>,
    return
  }
  func.func @transform_0(%arg0: i32) -> (i32, i32, i32) {
    %c0_i32 = arith.constant 0 : i32
    %c0_i32_0 = arith.constant 0 : i32
    %c0_i32_1 = arith.constant 0 : i32
    return %arg0, %c0_i32, %c0_i32_0 : i32, i32, i32
  }
  func.func @transform_1(%arg0: i32) -> (i32, i32, i32) {
    %c0_i32 = arith.constant 0 : i32
    %c0_i32_0 = arith.constant 0 : i32
    %c0_i32_1 = arith.constant 0 : i32
    return %arg0, %c0_i32, %c0_i32_0 : i32, i32, i32
  }
  func.func @transform_2(%arg0: i32) -> (i32, i32, i32) {
    %c0_i32 = arith.constant 0 : i32
    %c0_i32_0 = arith.constant 0 : i32
    %c0_i32_1 = arith.constant 0 : i32
    return %arg0, %c0_i32, %c0_i32_0 : i32, i32, i32
  }
  func.func @transform_3(%arg0: i32) -> (i32, i32) {
    %c0_i32 = arith.constant 0 : i32
    %c0_i32_0 = arith.constant 0 : i32
    %c0_i32_1 = arith.constant 0 : i32
    return %c0_i32, %c0_i32_0 : i32, i32
  }
  func.func @transform_4(%arg0: i32) -> (i32, i32) {
    %c0_i32 = arith.constant 0 : i32
    %c0_i32_0 = arith.constant 0 : i32
    %c0_i32_1 = arith.constant 0 : i32
    return %c0_i32, %c0_i32_0 : i32, i32
  }
  func.func @transform_5(%arg0: i32) -> (i32, i32) {
    %c0_i32 = arith.constant 0 : i32
    %c0_i32_0 = arith.constant 0 : i32
    %c0_i32_1 = arith.constant 0 : i32
    return %c0_i32, %c0_i32_0 : i32, i32
  }
  func.func @transform_6(%arg0: i32) -> (i32, i32) {
    %c0_i32 = arith.constant 0 : i32
    %c0_i32_0 = arith.constant 0 : i32
    %c0_i32_1 = arith.constant 0 : i32
    return %c0_i32, %c0_i32_0 : i32, i32
  }
  func.func @transform_7(%arg0: i32) -> (i32, i32, i32) {
    %c0_i32 = arith.constant 0 : i32
    %c0_i32_0 = arith.constant 0 : i32
    %c0_i32_1 = arith.constant 0 : i32
    return %arg0, %c0_i32, %c0_i32_0 : i32, i32, i32
  }
  func.func @transform_8(%arg0: i32) -> (i32, i32, i32, i32) {
    %c0_i32 = arith.constant 0 : i32
    %c0_i32_0 = arith.constant 0 : i32
    %c0_i32_1 = arith.constant 0 : i32
    %c0_i32_2 = arith.constant 0 : i32
    return %arg0, %c0_i32, %c0_i32_0, %c0_i32_1 : i32, i32, i32, i32
  }
}

</mosaic_0001>

<llo_original>
// kernel: tpu_custom_call.1
$region0: #{tpu_custom_call.1}
  #allocation0 [shape = 'u32[]', space=smem, size = 0x4, offset = 0x4, fixed_abs, tag = 'smem constant byte address 0x4 - core index']
  #allocation1 [shape = 'u32[72,128]{1,0:T(1,128)}', space=vmem, size = 0x9000, scoped, tag = 'internal scratch']
  %s0 = inlined_call_operand.hbm [shape: f32[2,8,32], index: 0, kind: input, shape index: {}]
  %s1 = inlined_call_operand.hbm [shape: f32[2,8,32], index: 1, kind: input, shape index: {}]
  %s2 = inlined_call_operand.hbm [shape: f32[2,8,32], index: 2, kind: input, shape index: {}]
  %s3 = inlined_call_operand.hbm [shape: bf16[32,32], index: 3, kind: input, shape index: {}]
  %s4 = inlined_call_operand.hbm [shape: bf16[32,32], index: 4, kind: input, shape index: {}]
  %s5 = inlined_call_operand.hbm [shape: bf16[32,32], index: 5, kind: input, shape index: {}]
  %s6 = inlined_call_operand.hbm [shape: bf16[32,32], index: 6, kind: input, shape index: {}]
  %s7 = inlined_call_operand.hbm [shape: f32[2,8,32], index: 7, kind: output, shape index: {0}]
  %s8 = inlined_call_operand.hbm [shape: f32[2,4,8,8], index: 8, kind: output, shape index: {1}]
  %9 = xla_tuple %s7, %s8
  %s10 = sld [smem:[#allocation0]]
  $region97: #{tpu_custom_call.1} parent=0
    _
  %s12 = ssub.s32 1, %s10
  %s13 = scalar_select 0, %s12, %s10
  $region1: #{tpu_custom_call.1} parent=0
    #allocation2 [shape = 'u8[8192]{0}', space=vmem, size = 0x2000, scoped, tag = 'input window, operand 0']
    #allocation3 [shape = 's32[2]{0}', space=sflag, size = 0x8, scoped, tag = 'scoped memory for tpu_custom_call.1']
    #allocation4 [shape = 's32[2]{0}', space=sflag, size = 0x8, scoped, tag = 'scoped memory for tpu_custom_call.1']
    #allocation5 [shape = 'u8[8192]{0}', space=vmem, size = 0x2000, scoped, tag = 'input window, operand 1']
    #allocation6 [shape = 's32[2]{0}', space=sflag, size = 0x8, scoped, tag = 'scoped memory for tpu_custom_call.1']
    #allocation7 [shape = 'u8[8192]{0}', space=vmem, size = 0x2000, scoped, tag = 'input window, operand 2']
    #allocation8 [shape = 'u8[8192]{0}', space=vmem, size = 0x2000, scoped, tag = 'input window, operand 3, single buffered']
    #allocation9 [shape = 's32[1]{0}', space=sflag, size = 0x4, scoped, tag = 'scoped memory for tpu_custom_call.1']
    #allocation10 [shape = 'u8[8192]{0}', space=vmem, size = 0x2000, scoped, tag = 'input window, operand 4, single buffered']
    #allocation11 [shape = 'u8[8192]{0}', space=vmem, size = 0x2000, scoped, tag = 'input window, operand 5, single buffered']
    #allocation12 [shape = 's32[1]{0}', space=sflag, size = 0x4, scoped, tag = 'scoped memory for tpu_custom_call.1']
    #allocation13 [shape = 'u8[8192]{0}', space=vmem, size = 0x2000, scoped, tag = 'input window, operand 6, single buffered']
    #allocation14 [shape = 'u8[8192]{0}', space=vmem, size = 0x2000, scoped, tag = 'output window, operand 0']
    #allocation15 [shape = 'u8[32768]{0}', space=vmem, size = 0x8000, scoped, tag = 'output window, operand 1']
    #allocation16 [shape = 's32[2]{0}', space=sflag, size = 0x8, scoped, tag = 'scoped memory for tpu_custom_call.1']
    %14 = vsyncpa [#allocation3], 0
    %s15 = scalar_lea.sflag [#allocation3], 1
    %16 = vsyncpa %s15, 0
    %17 = vsyncpa [#allocation6], 0
    %s18 = scalar_lea.sflag [#allocation6], 1
    %19 = vsyncpa %s18, 0
    %20 = vsyncpa [#allocation9], 0
    %21 = vsyncpa [#allocation12], 0
    %22 = vsyncpa [#allocation4], 0
    %s23 = scalar_lea.sflag [#allocation4], 1
    %24 = vsyncpa %s23, 0
    %25 = vsyncpa [#allocation16], 0
    %s26 = scalar_lea.sflag [#allocation16], 1
    %27 = vsyncpa %s26, 0
    loop: start=0, step=1, limit=4
    $region2: #{tpu_custom_call.1} parent=1 // loop_pre_header
      _
    $region3: #{tpu_custom_call.1} parent=1 // loop_header
      %s29 = sphi 0, %s33
      %p30 = scmp.ge.s32.totalorder %s29, 4
      %s39 = sphi 0, %s41
      %s42 = sphi 0, %s39
      %s43 = sphi 0, %s42
      %s59 = sphi 0, %s43
      %s65 = sphi 0, %s67
      %s68 = sphi 0, %s65
      %s69 = sphi 0, %s68
      %s85 = sphi 0, %s69
      %s91 = sphi 0, %s93
      %s94 = sphi 0, %s91
      %s95 = sphi 0, %s94
      %s111 = sphi 0, %s95
      %s115 = sphi 0, %s115
      %s117 = sphi 0, %s115
      %s118 = sphi 0, %s117
      %s132 = sphi 0, %s118
      %s136 = sphi 0, %s136
      %s138 = sphi 0, %s136
      %s139 = sphi 0, %s138
      %s153 = sphi 0, %s139
      %s157 = sphi 0, %s157
      %s159 = sphi 0, %s157
      %s160 = sphi 0, %s159
      %s174 = sphi 0, %s160
      %s178 = sphi 0, %s178
      %s180 = sphi 0, %s178
      %s181 = sphi 0, %s180
      %s195 = sphi 0, %s181
      %s201 = sphi 0, %s203
      %s204 = sphi 0, %s201
      %s205 = sphi 0, %s204
      %s221 = sphi 0, %s205
      %s227 = sphi 0, %s229
      %s230 = sphi 0, %s227
      %s231 = sphi 0, %s230
      %s247 = sphi 0, %s231
    $region4: #{tpu_custom_call.1} parent=1 // loop_header_branch
      %32 = sbr.rel (%p30) target = $region8
    $region5: #{tpu_custom_call.1} parent=1 // loop_body
      %s34 = ssub.s32 %s29, 1
      %s35 = ssub.s32 %s29, 2
      %s36 = sadd.s32 %s29, 1
      %s37 = ssub.s32 %s29, %s36
      %p38 = scmp.eq.s32.totalorder %s37, 0
      %s40 = sadd.s32 %s39, 1
      %s41 = scalar_select %p38, %s39, %s40
      %p44 = pneg %p38
      %p45 = scmp.eq.s32.totalorder %s29, 1
      %p46 = por %p44, %p45
      %p47 = scmp.ne.s32.totalorder %s39, %s42
      %p48 = scmp.eq.s32.totalorder %s29, 0
      %p49 = por %p47, %p48
      %p50 = scmp.ne.s32.totalorder %s39, %s42
      %p51 = scmp.eq.s32.totalorder %s34, 1
      %p52 = por %p50, %p51
      %p53 = scmp.ne.s32.totalorder %s42, %s43
      %p54 = scmp.eq.s32.totalorder %s34, 0
      %p55 = por %p53, %p54
      %p56 = scmp.ne.s32.totalorder %s42, %s43
      %p57 = scmp.eq.s32.totalorder %s35, 1
      %p58 = por %p56, %p57
      %p60 = scmp.ne.s32.totalorder %s43, %s59
      %p61 = scmp.eq.s32.totalorder %s35, 0
      %p62 = por %p60, %p61
      %s63 = ssub.s32 %s29, %s36
      %p64 = scmp.eq.s32.totalorder %s63, 0
      %s66 = sadd.s32 %s65, 1
      %s67 = scalar_select %p64, %s65, %s66
      %p70 = pneg %p64
      %p71 = scmp.eq.s32.totalorder %s29, 1
      %p72 = por %p70, %p71
      %p73 = scmp.ne.s32.totalorder %s65, %s68
      %p74 = scmp.eq.s32.totalorder %s29, 0
      %p75 = por %p73, %p74
      %p76 = scmp.ne.s32.totalorder %s65, %s68
      %p77 = scmp.eq.s32.totalorder %s34, 1
      %p78 = por %p76, %p77
      %p79 = scmp.ne.s32.totalorder %s68, %s69
      %p80 = scmp.eq.s32.totalorder %s34, 0
      %p81 = por %p79, %p80
      %p82 = scmp.ne.s32.totalorder %s68, %s69
      %p83 = scmp.eq.s32.totalorder %s35, 1
      %p84 = por %p82, %p83
      %p86 = scmp.ne.s32.totalorder %s69, %s85
      %p87 = scmp.eq.s32.totalorder %s35, 0
      %p88 = por %p86, %p87
      %s89 = ssub.s32 %s29, %s36
      %p90 = scmp.eq.s32.totalorder %s89, 0
      %s92 = sadd.s32 %s91, 1
      %s93 = scalar_select %p90, %s91, %s92
      %p96 = pneg %p90
      %p97 = scmp.eq.s32.totalorder %s29, 1
      %p98 = por %p96, %p97
      %p99 = scmp.ne.s32.totalorder %s91, %s94
      %p100 = scmp.eq.s32.totalorder %s29, 0
      %p101 = por %p99, %p100
      %p102 = scmp.ne.s32.totalorder %s91, %s94
      %p103 = scmp.eq.s32.totalorder %s34, 1
      %p104 = por %p102, %p103
      %p105 = scmp.ne.s32.totalorder %s94, %s95
      %p106 = scmp.eq.s32.totalorder %s34, 0
      %p107 = por %p105, %p106
      %p108 = scmp.ne.s32.totalorder %s94, %s95
      %p109 = scmp.eq.s32.totalorder %s35, 1
      %p110 = por %p108, %p109
      %p112 = scmp.ne.s32.totalorder %s95, %s111
      %p113 = scmp.eq.s32.totalorder %s35, 0
      %p114 = por %p112, %p113
      %s116 = sadd.s32 %s115, 1
      %p119 = scmp.eq.s32.totalorder %s29, 1
      %p120 = scmp.ne.s32.totalorder %s115, %s117
      %p121 = scmp.eq.s32.totalorder %s29, 0
      %p122 = por %p120, %p121
      %p123 = scmp.ne.s32.totalorder %s115, %s117
      %p124 = scmp.eq.s32.totalorder %s34, 1
      %p125 = por %p123, %p124
      %p126 = scmp.ne.s32.totalorder %s117, %s118
      %p127 = scmp.eq.s32.totalorder %s34, 0
      %p128 = por %p126, %p127
      %p129 = scmp.ne.s32.totalorder %s117, %s118
      %p130 = scmp.eq.s32.totalorder %s35, 1
      %p131 = por %p129, %p130
      %p133 = scmp.ne.s32.totalorder %s118, %s132
      %p134 = scmp.eq.s32.totalorder %s35, 0
      %p135 = por %p133, %p134
      %s137 = sadd.s32 %s136, 1
      %p140 = scmp.eq.s32.totalorder %s29, 1
      %p141 = scmp.ne.s32.totalorder %s136, %s138
      %p142 = scmp.eq.s32.totalorder %s29, 0
      %p143 = por %p141, %p142
      %p144 = scmp.ne.s32.totalorder %s136, %s138
      %p145 = scmp.eq.s32.totalorder %s34, 1
      %p146 = por %p144, %p145
      %p147 = scmp.ne.s32.totalorder %s138, %s139
      %p148 = scmp.eq.s32.totalorder %s34, 0
      %p149 = por %p147, %p148
      %p150 = scmp.ne.s32.totalorder %s138, %s139
      %p151 = scmp.eq.s32.totalorder %s35, 1
      %p152 = por %p150, %p151
      %p154 = scmp.ne.s32.totalorder %s139, %s153
      %p155 = scmp.eq.s32.totalorder %s35, 0
      %p156 = por %p154, %p155
      %s158 = sadd.s32 %s157, 1
      %p161 = scmp.eq.s32.totalorder %s29, 1
      %p162 = scmp.ne.s32.totalorder %s157, %s159
      %p163 = scmp.eq.s32.totalorder %s29, 0
      %p164 = por %p162, %p163
      %p165 = scmp.ne.s32.totalorder %s157, %s159
      %p166 = scmp.eq.s32.totalorder %s34, 1
      %p167 = por %p165, %p166
      %p168 = scmp.ne.s32.totalorder %s159, %s160
      %p169 = scmp.eq.s32.totalorder %s34, 0
      %p170 = por %p168, %p169
      %p171 = scmp.ne.s32.totalorder %s159, %s160
      %p172 = scmp.eq.s32.totalorder %s35, 1
      %p173 = por %p171, %p172
      %p175 = scmp.ne.s32.totalorder %s160, %s174
      %p176 = scmp.eq.s32.totalorder %s35, 0
      %p177 = por %p175, %p176
      %s179 = sadd.s32 %s178, 1
      %p182 = scmp.eq.s32.totalorder %s29, 1
      %p183 = scmp.ne.s32.totalorder %s178, %s180
      %p184 = scmp.eq.s32.totalorder %s29, 0
      %p185 = por %p183, %p184
      %p186 = scmp.ne.s32.totalorder %s178, %s180
      %p187 = scmp.eq.s32.totalorder %s34, 1
      %p188 = por %p186, %p187
      %p189 = scmp.ne.s32.totalorder %s180, %s181
      %p190 = scmp.eq.s32.totalorder %s34, 0
      %p191 = por %p189, %p190
      %p192 = scmp.ne.s32.totalorder %s180, %s181
      %p193 = scmp.eq.s32.totalorder %s35, 1
      %p194 = por %p192, %p193
      %p196 = scmp.ne.s32.totalorder %s181, %s195
      %p197 = scmp.eq.s32.totalorder %s35, 0
      %p198 = por %p196, %p197
      %s199 = ssub.s32 %s29, %s36
      %p200 = scmp.eq.s32.totalorder %s199, 0
      %s202 = sadd.s32 %s201, 1
      %s203 = scalar_select %p200, %s201, %s202
      %p206 = pneg %p200
      %p207 = scmp.eq.s32.totalorder %s29, 1
      %p208 = por %p206, %p207
      %p209 = scmp.ne.s32.totalorder %s201, %s204
      %p210 = scmp.eq.s32.totalorder %s29, 0
      %p211 = por %p209, %p210
      %p212 = scmp.ne.s32.totalorder %s201, %s204
      %p213 = scmp.eq.s32.totalorder %s34, 1
      %p214 = por %p212, %p213
      %p215 = scmp.ne.s32.totalorder %s204, %s205
      %p216 = scmp.eq.s32.totalorder %s34, 0
      %p217 = por %p215, %p216
      %p218 = scmp.ne.s32.totalorder %s204, %s205
      %p219 = scmp.eq.s32.totalorder %s35, 1
      %p220 = por %p218, %p219
      %p222 = scmp.ne.s32.totalorder %s205, %s221
      %p223 = scmp.eq.s32.totalorder %s35, 0
      %p224 = por %p222, %p223
      %s225 = ssub.s32 %s29, %s36
      %p226 = scmp.eq.s32.totalorder %s225, 0
      %s228 = sadd.s32 %s227, 1
      %s229 = scalar_select %p226, %s227, %s228
      %p232 = pneg %p226
      %p233 = scmp.eq.s32.totalorder %s29, 1
      %p234 = por %p232, %p233
      %p235 = scmp.ne.s32.totalorder %s227, %s230
      %p236 = scmp.eq.s32.totalorder %s29, 0
      %p237 = por %p235, %p236
      %p238 = scmp.ne.s32.totalorder %s227, %s230
      %p239 = scmp.eq.s32.totalorder %s34, 1
      %p240 = por %p238, %p239
      %p241 = scmp.ne.s32.totalorder %s230, %s231
      %p242 = scmp.eq.s32.totalorder %s34, 0
      %p243 = por %p241, %p242
      %p244 = scmp.ne.s32.totalorder %s230, %s231
      %p245 = scmp.eq.s32.totalorder %s35, 1
      %p246 = por %p244, %p245
      %p248 = scmp.ne.s32.totalorder %s231, %s247
      %p249 = scmp.eq.s32.totalorder %s35, 0
      %p250 = por %p248, %p249
      %p251 = scmp.le.s32.totalorder 1, %s29
      %p252 = scmp.lt.s32.totalorder %s29, 3
      %p253 = pnand %p251, %p252
      %p254 = pneg %p253
      // Predicated region
      $region9: #{tpu_custom_call.1} parent=5 // pred_check
        _
      $region10: #{tpu_custom_call.1} parent=5 // pred_check_branch
        %256 = sbr.rel (%p253) target = $region12
      $region11: #{tpu_custom_call.1} parent=5 // pred_region
        %s257 = ssub.s32 %s29, 1
        // Predicated region
        $region13: #{tpu_custom_call.1} parent=11 // pred_check
          %p258 = pneg %p128
        $region14: #{tpu_custom_call.1} parent=11 // pred_check_branch
          %260 = sbr.rel (%p258) target = $region16
        $region15: #{tpu_custom_call.1} parent=11 // pred_region
          %262 = vsyncadd [#allocation9], 0
          %s263 = sshll.u32 %s3, 4
          %s264 = int_to_ptr.hbm [resolvable:$true] %s263
          %s265 = sshll.u32 [#allocation8], 4
          %s266 = int_to_ptr.vmem [resolvable:$true] %s265
          %271 = dma.hbm_to_vmem [thread:$0]  %s264, 256, %s266, [#allocation9], 64, 64, 4
        $region16: #{tpu_custom_call.1} parent=11 // pred_fallthru
          _
        // Predicated region
        $region17: #{tpu_custom_call.1} parent=11 // pred_check
          %p272 = pneg %p149
        $region18: #{tpu_custom_call.1} parent=11 // pred_check_branch
          %274 = sbr.rel (%p272) target = $region20
        $region19: #{tpu_custom_call.1} parent=11 // pred_region
          %276 = vsyncadd [#allocation9], 0
          %s277 = sshll.u32 %s4, 4
          %s278 = int_to_ptr.hbm [resolvable:$true] %s277
          %s279 = sshll.u32 [#allocation10], 4
          %s280 = int_to_ptr.vmem [resolvable:$true] %s279
          %285 = dma.hbm_to_vmem [thread:$0]  %s278, 256, %s280, [#allocation9], 64, 64, 4
        $region20: #{tpu_custom_call.1} parent=11 // pred_fallthru
          _
        // Predicated region
        $region21: #{tpu_custom_call.1} parent=11 // pred_check
          %p286 = pneg %p170
        $region22: #{tpu_custom_call.1} parent=11 // pred_check_branch
          %288 = sbr.rel (%p286) target = $region24
        $region23: #{tpu_custom_call.1} parent=11 // pred_region
          %290 = vsyncadd [#allocation12], 0
          %s291 = sshll.u32 %s5, 4
          %s292 = int_to_ptr.hbm [resolvable:$true] %s291
          %s293 = sshll.u32 [#allocation11], 4
          %s294 = int_to_ptr.vmem [resolvable:$true] %s293
          %299 = dma.hbm_to_vmem [thread:$0]  %s292, 256, %s294, [#allocation12], 64, 64, 4
        $region24: #{tpu_custom_call.1} parent=11 // pred_fallthru
          _
        // Predicated region
        $region25: #{tpu_custom_call.1} parent=11 // pred_check
          %p300 = pneg %p191
        $region26: #{tpu_custom_call.1} parent=11 // pred_check_branch
          %302 = sbr.rel (%p300) target = $region28
        $region27: #{tpu_custom_call.1} parent=11 // pred_region
          %304 = vsyncadd [#allocation12], 0
          %s305 = sshll.u32 %s6, 4
          %s306 = int_to_ptr.hbm [resolvable:$true] %s305
          %s307 = sshll.u32 [#allocation13], 4
          %s308 = int_to_ptr.vmem [resolvable:$true] %s307
          %313 = dma.hbm_to_vmem [thread:$0]  %s306, 256, %s308, [#allocation12], 64, 64, 4
        $region28: #{tpu_custom_call.1} parent=11 // pred_fallthru
          _
      $region12: #{tpu_custom_call.1} parent=5 // pred_fallthru
        _
      %p314 = scmp.lt.s32.totalorder %s29, 2
      // Predicated region
      $region29: #{tpu_custom_call.1} parent=5 // pred_check
        %p315 = pneg %p314
      $region30: #{tpu_custom_call.1} parent=5 // pred_check_branch
        %317 = sbr.rel (%p315) target = $region32
      $region31: #{tpu_custom_call.1} parent=5 // pred_region
        // Predicated region
        $region33: #{tpu_custom_call.1} parent=31 // pred_check
          %p318 = pneg %p49
        $region34: #{tpu_custom_call.1} parent=31 // pred_check_branch
          %320 = sbr.rel (%p318) target = $region36
        $region35: #{tpu_custom_call.1} parent=31 // pred_region
          %s321 = sand.u32 %s39, 1
          %s322 = scalar_lea.sflag [#allocation3], %s321
          %s323 = sand.u32 %s39, 1
          %s324 = smul.addr %s323, 8
          %s325 = scalar_lea.vmem [#allocation2], %s324
          %327 = vsyncadd %s322, 0
          %s328 = smul.addr %s29, 8
          %s329 = scalar_lea.hbm %s0, %s328
          %s331 = sshll.u32 %s329, 4
          %s332 = int_to_ptr.hbm [resolvable:$true] %s331
          %s333 = sshll.u32 %s325, 4
          %s334 = int_to_ptr.vmem [resolvable:$true] %s333
          %336 = dma.hbm_to_vmem [thread:$0]  %s332, 128, %s334, %s322
        $region36: #{tpu_custom_call.1} parent=31 // pred_fallthru
          _
        // Predicated region
        $region37: #{tpu_custom_call.1} parent=31 // pred_check
          %p337 = pneg %p75
        $region38: #{tpu_custom_call.1} parent=31 // pred_check_branch
          %339 = sbr.rel (%p337) target = $region40
        $region39: #{tpu_custom_call.1} parent=31 // pred_region
          %s340 = sand.u32 %s29, 1
          %s341 = scalar_lea.sflag [#allocation6], %s340
          %s342 = sand.u32 %s65, 1
          %s343 = smul.addr %s342, 8
          %s344 = scalar_lea.vmem [#allocation5], %s343
          %346 = vsyncadd %s341, 0
          %s347 = smul.addr %s29, 8
          %s348 = scalar_lea.hbm %s1, %s347
          %s350 = sshll.u32 %s348, 4
          %s351 = int_to_ptr.hbm [resolvable:$true] %s350
          %s352 = sshll.u32 %s344, 4
          %s353 = int_to_ptr.vmem [resolvable:$true] %s352
          %355 = dma.hbm_to_vmem [thread:$0]  %s351, 128, %s353, %s341
        $region40: #{tpu_custom_call.1} parent=31 // pred_fallthru
          _
        // Predicated region
        $region41: #{tpu_custom_call.1} parent=31 // pred_check
          %p356 = pneg %p101
        $region42: #{tpu_custom_call.1} parent=31 // pred_check_branch
          %358 = sbr.rel (%p356) target = $region44
        $region43: #{tpu_custom_call.1} parent=31 // pred_region
          %s359 = sand.u32 %s29, 1
          %s360 = scalar_lea.sflag [#allocation6], %s359
          %s361 = sand.u32 %s91, 1
          %s362 = smul.addr %s361, 8
          %s363 = scalar_lea.vmem [#allocation7], %s362
          %365 = vsyncadd %s360, 0
          %s366 = smul.addr %s29, 8
          %s367 = scalar_lea.hbm %s2, %s366
          %s369 = sshll.u32 %s367, 4
          %s370 = int_to_ptr.hbm [resolvable:$true] %s369
          %s371 = sshll.u32 %s363, 4
          %s372 = int_to_ptr.vmem [resolvable:$true] %s371
          %374 = dma.hbm_to_vmem [thread:$0]  %s370, 128, %s372, %s360
        $region44: #{tpu_custom_call.1} parent=31 // pred_fallthru
          _
      $region32: #{tpu_custom_call.1} parent=5 // pred_fallthru
        _
      %p375 = scmp.le.s32.totalorder 1, %s29
      %p376 = scmp.lt.s32.totalorder %s29, 3
      %p377 = pnand %p375, %p376
      %p378 = pneg %p377
      // Predicated region
      $region45: #{tpu_custom_call.1} parent=5 // pred_check
        _
      $region46: #{tpu_custom_call.1} parent=5 // pred_check_branch
        %380 = sbr.rel (%p377) target = $region48
      $region47: #{tpu_custom_call.1} parent=5 // pred_region
        %s381 = ssub.s32 %s29, 1
        %s382 = sand.u32 %s42, 1
        %s383 = scalar_lea.sflag [#allocation3], %s382
        %s384 = sand.u32 %s42, 1
        %s385 = smul.addr %s384, 8
        %s386 = scalar_lea.vmem [#allocation2], %s385
        // Predicated region
        $region49: #{tpu_custom_call.1} parent=47 // pred_check
          %p387 = pneg %p55
        $region50: #{tpu_custom_call.1} parent=47 // pred_check_branch
          %389 = sbr.rel (%p387) target = $region52
        $region51: #{tpu_custom_call.1} parent=47 // pred_region
          %391 = dma.done %s383, 128
        $region52: #{tpu_custom_call.1} parent=47 // pred_fallthru
          _
        %s392 = sand.u32 %s34, 1
        %s393 = scalar_lea.sflag [#allocation6], %s392
        %s394 = sand.u32 %s68, 1
        %s395 = smul.addr %s394, 8
        %s396 = scalar_lea.vmem [#allocation5], %s395
        // Predicated region
        $region53: #{tpu_custom_call.1} parent=47 // pred_check
          %p397 = pneg %p81
        $region54: #{tpu_custom_call.1} parent=47 // pred_check_branch
          %399 = sbr.rel (%p397) target = $region56
        $region55: #{tpu_custom_call.1} parent=47 // pred_region
          %401 = dma.done %s393, 128
        $region56: #{tpu_custom_call.1} parent=47 // pred_fallthru
          _
        %s402 = sand.u32 %s34, 1
        %s403 = scalar_lea.sflag [#allocation6], %s402
        %s404 = sand.u32 %s94, 1
        %s405 = smul.addr %s404, 8
        %s406 = scalar_lea.vmem [#allocation7], %s405
        // Predicated region
        $region57: #{tpu_custom_call.1} parent=47 // pred_check
          %p407 = pneg %p107
        $region58: #{tpu_custom_call.1} parent=47 // pred_check_branch
          %409 = sbr.rel (%p407) target = $region60
        $region59: #{tpu_custom_call.1} parent=47 // pred_region
          %411 = dma.done %s403, 128
        $region60: #{tpu_custom_call.1} parent=47 // pred_fallthru
          _
        // Predicated region
        $region61: #{tpu_custom_call.1} parent=47 // pred_check
          %p412 = pneg %p128
        $region62: #{tpu_custom_call.1} parent=47 // pred_check_branch
          %414 = sbr.rel (%p412) target = $region64
        $region63: #{tpu_custom_call.1} parent=47 // pred_region
          %416 = dma.done [#allocation9], 256
        $region64: #{tpu_custom_call.1} parent=47 // pred_fallthru
          _
        // Predicated region
        $region65: #{tpu_custom_call.1} parent=47 // pred_check
          %p417 = pneg %p149
        $region66: #{tpu_custom_call.1} parent=47 // pred_check_branch
          %419 = sbr.rel (%p417) target = $region68
        $region67: #{tpu_custom_call.1} parent=47 // pred_region
          %421 = dma.done [#allocation9], 256
        $region68: #{tpu_custom_call.1} parent=47 // pred_fallthru
          _
        // Predicated region
        $region69: #{tpu_custom_call.1} parent=47 // pred_check
          %p422 = pneg %p170
        $region70: #{tpu_custom_call.1} parent=47 // pred_check_branch
          %424 = sbr.rel (%p422) target = $region72
        $region71: #{tpu_custom_call.1} parent=47 // pred_region
          %426 = dma.done [#allocation12], 256
        $region72: #{tpu_custom_call.1} parent=47 // pred_fallthru
          _
        // Predicated region
        $region73: #{tpu_custom_call.1} parent=47 // pred_check
          %p427 = pneg %p191
        $region74: #{tpu_custom_call.1} parent=47 // pred_check_branch
          %429 = sbr.rel (%p427) target = $region76
        $region75: #{tpu_custom_call.1} parent=47 // pred_region
          %431 = dma.done [#allocation12], 256
        $region76: #{tpu_custom_call.1} parent=47 // pred_fallthru
          _
        %s432 = sand.u32 %s42, 1
        %s433 = scalar_lea.sflag [#allocation3], %s432
        %s434 = sand.u32 %s42, 1
        %s435 = smul.addr %s434, 8
        %s436 = scalar_lea.vmem [#allocation2], %s435
        %p437 = pneg %p55
        %p438 = pneg %p52
        %s439 = sand.u32 %s34, 1
        %s440 = scalar_lea.sflag [#allocation6], %s439
        %s441 = sand.u32 %s68, 1
        %s442 = smul.addr %s441, 8
        %s443 = scalar_lea.vmem [#allocation5], %s442
        %p444 = pneg %p81
        %p445 = pneg %p78
        %s446 = sand.u32 %s34, 1
        %s447 = scalar_lea.sflag [#allocation6], %s446
        %s448 = sand.u32 %s94, 1
        %s449 = smul.addr %s448, 8
        %s450 = scalar_lea.vmem [#allocation7], %s449
        %p451 = pneg %p107
        %p452 = pneg %p104
        %p453 = pneg %p128
        %p454 = pneg %p125
        %p455 = pneg %p149
        %p456 = pneg %p146
        %p457 = pneg %p170
        %p458 = pneg %p167
        %p459 = pneg %p191
        %p460 = pneg %p188
        %p461 = pneg %p217
        %p462 = pneg %p214
        %s463 = sand.u32 %s204, 1
        %s464 = scalar_lea.sflag [#allocation4], %s463
        %s465 = sand.u32 %s204, 1
        %s466 = smul.addr %s465, 8
        %s467 = scalar_lea.vmem [#allocation14], %s466
        %p468 = pneg %p243
        %p469 = pneg %p240
        %s470 = sand.u32 %s230, 1
        %s471 = scalar_lea.sflag [#allocation16], %s470
        %s472 = sand.u32 %s230, 1
        %s473 = smul.addr %s472, 32
        %s474 = scalar_lea.vmem [#allocation15], %s473
        %v476 = vld [vmem:[%s386] sm:$0xff]
        %v477 = vpack.c.bf16 %v476, %v476
        %v478 = vld [vmem:[%s396] sm:$0xff]
        %v479 = vpack.c.bf16 %v478, %v478
        %v480 = vld [vmem:[%s406] sm:$0xff]
        %v481 = vpack.c.bf16 %v480, %v480
        %v482 = vld [vmem:[#allocation8] sm:$0xf]
        %v483 = vld [vmem:[#allocation8 + $0x4] sm:$0xf]
        %v484 = vld [vmem:[#allocation8 + $0x8] sm:$0xf]
        %v485 = vld [vmem:[#allocation8 + $0xc] sm:$0xf]
        %v490 = vunpack.c.l.b16 %v482
        %v491 = vunpack.c.l.b16 %v483
        %v492 = vunpack.c.l.b16 %v484
        %v493 = vunpack.c.l.b16 %v485
        %v494 = vpack.c.b16 %v491, %v490
        %v495 = vpack.c.b16 %v493, %v492
        %vm498 = vcmask 261120
        %v500 = vsel %vm498, %v477, 0
        %502 = vmatpush.bf16.msra.mxu0 0
        %503 = vmatpush.bf16.msra.mxu0 0
        %504 = vmatpush.bf16.msra.mxu0 0
        %505 = vmatpush.bf16.msra.mxu0 0
        %506 = vmatpush.bf16.msra.mxu0 0
        %507 = vmatpush.bf16.msra.mxu0 0
        %508 = vmatpush.bf16.msra.mxu0 %v495
        %509 = vmatpush.bf16.msra.mxu0 %v494
        %510 = vmatmul.bf16.gmra.mxu0 %v500
        %v511 = vpop.f32.mrf.mxu0
        %v512 = vadd.f32 0.0, %v511
        %v513 = vpop.f32.mrf.mxu0
        %514 = vdwg.mxu0
        %v515 = vld [vmem:[#allocation10] sm:$0xf]
        %v516 = vld [vmem:[#allocation10 + $0x4] sm:$0xf]
        %v517 = vld [vmem:[#allocation10 + $0x8] sm:$0xf]
        %v518 = vld [vmem:[#allocation10 + $0xc] sm:$0xf]
        %v523 = vunpack.c.l.b16 %v515
        %v524 = vunpack.c.l.b16 %v516
        %v525 = vunpack.c.l.b16 %v517
        %v526 = vunpack.c.l.b16 %v518
        %v527 = vpack.c.b16 %v524, %v523
        %v528 = vpack.c.b16 %v526, %v525
        %v532 = vsel %vm498, %v479, 0
        %534 = vmatpush.bf16.msra.mxu0 0
        %535 = vmatpush.bf16.msra.mxu0 0
        %536 = vmatpush.bf16.msra.mxu0 0
        %537 = vmatpush.bf16.msra.mxu0 0
        %538 = vmatpush.bf16.msra.mxu0 0
        %539 = vmatpush.bf16.msra.mxu0 0
        %540 = vmatpush.bf16.msra.mxu0 %v528
        %541 = vmatpush.bf16.msra.mxu0 %v527
        %542 = vmatmul.bf16.gmra.mxu0 %v532
        %v543 = vpop.f32.mrf.mxu0
        %v544 = vadd.f32 0.0, %v543
        %v545 = vpop.f32.mrf.mxu0
        %546 = vdwg.mxu0
        %v547 = vld [vmem:[#allocation11] sm:$0xf]
        %v548 = vld [vmem:[#allocation11 + $0x4] sm:$0xf]
        %v549 = vld [vmem:[#allocation11 + $0x8] sm:$0xf]
        %v550 = vld [vmem:[#allocation11 + $0xc] sm:$0xf]
        %v555 = vunpack.c.l.b16 %v547
        %v556 = vunpack.c.l.b16 %v548
        %v557 = vunpack.c.l.b16 %v549
        %v558 = vunpack.c.l.b16 %v550
        %v559 = vpack.c.b16 %v556, %v555
        %v560 = vpack.c.b16 %v558, %v557
        %v564 = vsel %vm498, %v481, 0
        %566 = vmatpush.bf16.msra.mxu0 0
        %567 = vmatpush.bf16.msra.mxu0 0
        %568 = vmatpush.bf16.msra.mxu0 0
        %569 = vmatpush.bf16.msra.mxu0 0
        %570 = vmatpush.bf16.msra.mxu0 0
        %571 = vmatpush.bf16.msra.mxu0 0
        %572 = vmatpush.bf16.msra.mxu0 %v560
        %573 = vmatpush.bf16.msra.mxu0 %v559
        %574 = vmatmul.bf16.gmra.mxu0 %v564
        %v575 = vpop.f32.mrf.mxu0
        %v576 = vadd.f32 0.0, %v575
        %v577 = vpop.f32.mrf.mxu0
        %578 = vdwg.mxu0
        %v579 = vmul.f32 %v512, 0.35355338
        %v580 = vpack.c.bf16 %v579, %v579
        %v581 = vpack.c.bf16 %v544, %v544
        %v582 = vpack.c.bf16 %v576, %v576
        %vm583 = vcmask 64512
        %v585 = vsel %vm583, %v580, 0
        %v588 = vsel %vm583, %v581, 0
        %590 = vmatpush.bf16.xpose.msra.mxu0 0
        %591 = vmatpush.bf16.xpose.msra.mxu0 0
        %592 = vmatpush.bf16.xpose.msra.mxu0 0
        %593 = vmatpush.bf16.xpose.msra.mxu0 0
        %594 = vmatpush.bf16.xpose.msra.mxu0 0
        %595 = vmatpush.bf16.xpose.msra.mxu0 0
        %596 = vmatpush.bf16.xpose.msra.mxu0 0
        %597 = vmatpush.bf16.xpose.msra.mxu0 %v588
        %598 = vmatmul.bf16.gmra.mxu0 %v585
        %v599 = vpop.f32.mrf.mxu0
        %v600 = vadd.f32 0.0, %v599
        %v601 = vpop.f32.mrf.mxu0
        %602 = vdwg.mxu0
        %v603 = vsel %vm583, %v600, -inf
        %604 = vmax.xlane.f32.xlu0 %v603
        %v605 = vpop.xlane.xlu0 %604
        %v606 = vsub.f32 %v600, %v605
        %v607 = vmul.f32 %v606, 1.442695
        %v608 = vpow.pop %v607
        %v609 = vsel %vm583, %v608, 0.0
        %610 = vadd.xlane.f32.xlu0 %v609
        %v611 = vpop.xlane.xlu0 %610
        %v612 = vrcp.pop %v611
        %v613 = vmul.f32 %v608, %v612
        %614 = vst.msk [vmem:[%s474] sm:$0xff] %vm583, %v613
        %v615 = vpack.c.bf16 %v613, %v613
        %v617 = vsel %vm583, %v615, 0
        %vm619 = vcmask 1043456
        %v621 = vsel %vm619, %v582, 0
        %623 = vmatpush.bf16.msra.mxu0 0
        %624 = vmatpush.bf16.msra.mxu0 0
        %625 = vmatpush.bf16.msra.mxu0 0
        %626 = vmatpush.bf16.msra.mxu0 0
        %627 = vmatpush.bf16.msra.mxu0 0
        %628 = vmatpush.bf16.msra.mxu0 0
        %629 = vmatpush.bf16.msra.mxu0 0
        %630 = vmatpush.bf16.msra.mxu0 %v621
        %631 = vmatmul.bf16.gmra.mxu0 %v617
        %v632 = vpop.f32.mrf.mxu0
        %v633 = vadd.f32 0.0, %v632
        %v634 = vpop.f32.mrf.mxu0
        %635 = vdwg.mxu0
        %v637 = vunpack.c.l.b16 %v580
        %v638 = vpack.c.b16 %v637, %v637
        %639 = vrot.lane.b32.xlu0 %v638, 120
        %v640 = vpop.permute.xlu0 %639
        %v642 = vunpack.c.l.b16 %v581
        %v643 = vpack.c.b16 %v642, %v642
        %644 = vrot.lane.b32.xlu0 %v643, 120
        %v645 = vpop.permute.xlu0 %644
        %v647 = vsel %vm583, %v640, 0
        %v650 = vsel %vm583, %v645, 0
        %652 = vmatpush.bf16.xpose.msra.mxu0 0
        %653 = vmatpush.bf16.xpose.msra.mxu0 0
        %654 = vmatpush.bf16.xpose.msra.mxu0 0
        %655 = vmatpush.bf16.xpose.msra.mxu0 0
        %656 = vmatpush.bf16.xpose.msra.mxu0 0
        %657 = vmatpush.bf16.xpose.msra.mxu0 0
        %658 = vmatpush.bf16.xpose.msra.mxu0 0
        %659 = vmatpush.bf16.xpose.msra.mxu0 %v650
        %660 = vmatmul.bf16.gmra.mxu0 %v647
        %v661 = vpop.f32.mrf.mxu0
        %v662 = vadd.f32 0.0, %v661
        %v663 = vpop.f32.mrf.mxu0
        %664 = vdwg.mxu0
        %v665 = vsel %vm583, %v662, -inf
        %666 = vmax.xlane.f32.xlu0 %v665
        %v667 = vpop.xlane.xlu0 %666
        %v668 = vsub.f32 %v662, %v667
        %v669 = vmul.f32 %v668, 1.442695
        %v670 = vpow.pop %v669
        %v671 = vsel %vm583, %v670, 0.0
        %672 = vadd.xlane.f32.xlu0 %v671
        %v673 = vpop.xlane.xlu0 %672
        %v674 = vrcp.pop %v673
        %v675 = vmul.f32 %v670, %v674
        %s676 = scalar_lea.vmem %s474, 8 [#allocation15]
        %677 = vst.msk [vmem:[%s676] sm:$0xff] %vm583, %v675
        %v678 = vpack.c.bf16 %v675, %v675
        %v680 = vunpack.c.l.b16 %v582
        %v681 = vpack.c.b16 %v680, %v680
        %682 = vrot.lane.b32.xlu0 %v681, 120
        %v683 = vpop.permute.xlu0 %682
        %v685 = vsel %vm583, %v678, 0
        %v688 = vsel %vm619, %v683, 0
        %690 = vmatpush.bf16.msra.mxu0 0
        %691 = vmatpush.bf16.msra.mxu0 0
        %692 = vmatpush.bf16.msra.mxu0 0
        %693 = vmatpush.bf16.msra.mxu0 0
        %694 = vmatpush.bf16.msra.mxu0 0
        %695 = vmatpush.bf16.msra.mxu0 0
        %696 = vmatpush.bf16.msra.mxu0 0
        %697 = vmatpush.bf16.msra.mxu0 %v688
        %698 = vmatmul.bf16.gmra.mxu0 %v685
        %v699 = vpop.f32.mrf.mxu0
        %v700 = vadd.f32 0.0, %v699
        %v701 = vpop.f32.mrf.mxu0
        %702 = vdwg.mxu0
        %703 = vrot.lane.b32.xlu0 %v638, 112
        %v704 = vpop.permute.xlu0 %703
        %705 = vrot.lane.b32.xlu0 %v643, 112
        %v706 = vpop.permute.xlu0 %705
        %v708 = vsel %vm583, %v704, 0
        %v711 = vsel %vm583, %v706, 0
        %713 = vmatpush.bf16.xpose.msra.mxu0 0
        %714 = vmatpush.bf16.xpose.msra.mxu0 0
        %715 = vmatpush.bf16.xpose.msra.mxu0 0
        %716 = vmatpush.bf16.xpose.msra.mxu0 0
        %717 = vmatpush.bf16.xpose.msra.mxu0 0
        %718 = vmatpush.bf16.xpose.msra.mxu0 0
        %719 = vmatpush.bf16.xpose.msra.mxu0 0
        %720 = vmatpush.bf16.xpose.msra.mxu0 %v711
        %721 = vmatmul.bf16.gmra.mxu0 %v708
        %v722 = vpop.f32.mrf.mxu0
        %v723 = vadd.f32 0.0, %v722
        %v724 = vpop.f32.mrf.mxu0
        %725 = vdwg.mxu0
        %v726 = vsel %vm583, %v723, -inf
        %727 = vmax.xlane.f32.xlu0 %v726
        %v728 = vpop.xlane.xlu0 %727
        %v729 = vsub.f32 %v723, %v728
        %v730 = vmul.f32 %v729, 1.442695
        %v731 = vpow.pop %v730
        %v732 = vsel %vm583, %v731, 0.0
        %733 = vadd.xlane.f32.xlu0 %v732
        %v734 = vpop.xlane.xlu0 %733
        %v735 = vrcp.pop %v734
        %v736 = vmul.f32 %v731, %v735
        %s737 = scalar_lea.vmem %s474, 16 [#allocation15]
        %738 = vst.msk [vmem:[%s737] sm:$0xff] %vm583, %v736
        %v739 = vpack.c.bf16 %v736, %v736
        %740 = vrot.lane.b32.xlu0 %v681, 112
        %v741 = vpop.permute.xlu0 %740
        %v743 = vsel %vm583, %v739, 0
        %v746 = vsel %vm619, %v741, 0
        %748 = vmatpush.bf16.msra.mxu0 0
        %749 = vmatpush.bf16.msra.mxu0 0
        %750 = vmatpush.bf16.msra.mxu0 0
        %751 = vmatpush.bf16.msra.mxu0 0
        %752 = vmatpush.bf16.msra.mxu0 0
        %753 = vmatpush.bf16.msra.mxu0 0
        %754 = vmatpush.bf16.msra.mxu0 0
        %755 = vmatpush.bf16.msra.mxu0 %v746
        %756 = vmatmul.bf16.gmra.mxu0 %v743
        %v757 = vpop.f32.mrf.mxu0
        %v758 = vadd.f32 0.0, %v757
        %v759 = vpop.f32.mrf.mxu0
        %760 = vdwg.mxu0
        %761 = vrot.lane.b32.xlu0 %v638, 104
        %v762 = vpop.permute.xlu0 %761
        %763 = vrot.lane.b32.xlu0 %v643, 104
        %v764 = vpop.permute.xlu0 %763
        %v766 = vsel %vm583, %v762, 0
        %v769 = vsel %vm583, %v764, 0
        %771 = vmatpush.bf16.xpose.msra.mxu0 0
        %772 = vmatpush.bf16.xpose.msra.mxu0 0
        %773 = vmatpush.bf16.xpose.msra.mxu0 0
        %774 = vmatpush.bf16.xpose.msra.mxu0 0
        %775 = vmatpush.bf16.xpose.msra.mxu0 0
        %776 = vmatpush.bf16.xpose.msra.mxu0 0
        %777 = vmatpush.bf16.xpose.msra.mxu0 0
        %778 = vmatpush.bf16.xpose.msra.mxu0 %v769
        %779 = vmatmul.bf16.gmra.mxu0 %v766
        %v780 = vpop.f32.mrf.mxu0
        %v781 = vadd.f32 0.0, %v780
        %v782 = vpop.f32.mrf.mxu0
        %783 = vdwg.mxu0
        %v784 = vsel %vm583, %v781, -inf
        %785 = vmax.xlane.f32.xlu0 %v784
        %v786 = vpop.xlane.xlu0 %785
        %v787 = vsub.f32 %v781, %v786
        %v788 = vmul.f32 %v787, 1.442695
        %v789 = vpow.pop %v788
        %v790 = vsel %vm583, %v789, 0.0
        %791 = vadd.xlane.f32.xlu0 %v790
        %v792 = vpop.xlane.xlu0 %791
        %v793 = vrcp.pop %v792
        %v794 = vmul.f32 %v789, %v793
        %s795 = scalar_lea.vmem %s474, 24 [#allocation15]
        %796 = vst.msk [vmem:[%s795] sm:$0xff] %vm583, %v794
        %v797 = vpack.c.bf16 %v794, %v794
        %798 = vrot.lane.b32.xlu0 %v681, 104
        %v799 = vpop.permute.xlu0 %798
        %v801 = vsel %vm583, %v797, 0
        %v804 = vsel %vm619, %v799, 0
        %806 = vmatpush.bf16.msra.mxu0 0
        %807 = vmatpush.bf16.msra.mxu0 0
        %808 = vmatpush.bf16.msra.mxu0 0
        %809 = vmatpush.bf16.msra.mxu0 0
        %810 = vmatpush.bf16.msra.mxu0 0
        %811 = vmatpush.bf16.msra.mxu0 0
        %812 = vmatpush.bf16.msra.mxu0 0
        %813 = vmatpush.bf16.msra.mxu0 %v804
        %814 = vmatmul.bf16.gmra.mxu0 %v801
        %v815 = vpop.f32.mrf.mxu0
        %v816 = vadd.f32 0.0, %v815
        %v817 = vpop.f32.mrf.mxu0
        %818 = vdwg.mxu0
        %820 = vrot.lane.b32.xlu0 %v700, 8
        %v821 = vpop.permute.xlu0 %820
        %824 = vrot.lane.b32.xlu0 %v758, 16
        %v825 = vpop.permute.xlu0 %824
        %828 = vrot.lane.b32.xlu0 %v816, 24
        %v829 = vpop.permute.xlu0 %828
        %v831 = vsel %vm583, %v633, %v821
        %vm832 = vcmask 130048
        %v833 = vsel %vm832, %v831, %v825
        %vm834 = vcmask 195584
        %v835 = vsel %vm834, %v833, %v829
        %v836 = vpack.c.bf16 %v835, %v835
        %v837 = vld [vmem:[#allocation13] sm:$0xf]
        %v838 = vld [vmem:[#allocation13 + $0x4] sm:$0xf]
        %v839 = vld [vmem:[#allocation13 + $0x8] sm:$0xf]
        %v840 = vld [vmem:[#allocation13 + $0xc] sm:$0xf]
        %v845 = vunpack.c.l.b16 %v837
        %v846 = vunpack.c.l.b16 %v838
        %v847 = vunpack.c.l.b16 %v839
        %v848 = vunpack.c.l.b16 %v840
        %v849 = vpack.c.b16 %v846, %v845
        %v850 = vpack.c.b16 %v848, %v847
        %v854 = vsel %vm498, %v836, 0
        %856 = vmatpush.bf16.msra.mxu0 0
        %857 = vmatpush.bf16.msra.mxu0 0
        %858 = vmatpush.bf16.msra.mxu0 0
        %859 = vmatpush.bf16.msra.mxu0 0
        %860 = vmatpush.bf16.msra.mxu0 0
        %861 = vmatpush.bf16.msra.mxu0 0
        %862 = vmatpush.bf16.msra.mxu0 %v850
        %863 = vmatpush.bf16.msra.mxu0 %v849
        %864 = vmatmul.bf16.gmra.mxu0 %v854
        %v865 = vpop.f32.mrf.mxu0
        %v866 = vadd.f32 0.0, %v865
        %v867 = vpop.f32.mrf.mxu0
        %868 = vdwg.mxu0
        %869 = vst.msk [vmem:[%s467] sm:$0xff] %vm498, %v866
        %s870 = sand.u32 %s204, 1
        %s871 = scalar_lea.sflag [#allocation4], %s870
        %s872 = sand.u32 %s204, 1
        %s873 = smul.addr %s872, 8
        %s874 = scalar_lea.vmem [#allocation14], %s873
        %s875 = sand.u32 %s230, 1
        %s876 = scalar_lea.sflag [#allocation16], %s875
        %s877 = sand.u32 %s230, 1
        %s878 = smul.addr %s877, 32
        %s879 = scalar_lea.vmem [#allocation15], %s878
        // Predicated region
        $region77: #{tpu_custom_call.1} parent=47 // pred_check
          %p880 = pneg %p214
        $region78: #{tpu_custom_call.1} parent=47 // pred_check_branch
          %882 = sbr.rel (%p880) target = $region80
        $region79: #{tpu_custom_call.1} parent=47 // pred_region
          %884 = vsyncadd %s871, 0
          %s885 = smul.addr %s34, 8
          %s886 = scalar_lea.hbm %s7, %s885
          %s888 = sshll.u32 %s874, 4
          %s889 = int_to_ptr.vmem [resolvable:$true] %s888
          %s890 = sshll.u32 %s886, 4
          %s891 = int_to_ptr.hbm [resolvable:$true] %s890
          %893 = dma.vmem_to_hbm [thread:$0]  %s889, 128, %s891, %s871
        $region80: #{tpu_custom_call.1} parent=47 // pred_fallthru
          _
        // Predicated region
        $region81: #{tpu_custom_call.1} parent=47 // pred_check
          %p894 = pneg %p240
        $region82: #{tpu_custom_call.1} parent=47 // pred_check_branch
          %896 = sbr.rel (%p894) target = $region84
        $region83: #{tpu_custom_call.1} parent=47 // pred_region
          %898 = vsyncadd %s876, 0
          %s899 = smul.addr %s34, 4
          %s900 = smul.addr %s899, 8
          %s901 = scalar_lea.hbm %s8, %s900
          %s902 = sshll.u32 %s879, 4
          %s903 = int_to_ptr.vmem [resolvable:$true] %s902
          %s904 = sshll.u32 %s901, 4
          %s905 = int_to_ptr.hbm [resolvable:$true] %s904
          %910 = dma.vmem_to_hbm [thread:$0]  %s903, 512, %s905, %s876, 128, 128, 8
        $region84: #{tpu_custom_call.1} parent=47 // pred_fallthru
          _
      $region48: #{tpu_custom_call.1} parent=5 // pred_fallthru
        _
      %p911 = scmp.le.s32.totalorder 2, %s29
      // Predicated region
      $region85: #{tpu_custom_call.1} parent=5 // pred_check
        %p912 = pneg %p911
      $region86: #{tpu_custom_call.1} parent=5 // pred_check_branch
        %914 = sbr.rel (%p912) target = $region88
      $region87: #{tpu_custom_call.1} parent=5 // pred_region
        %s915 = ssub.s32 %s29, 2
        // Predicated region
        $region89: #{tpu_custom_call.1} parent=87 // pred_check
          %p916 = pneg %p220
        $region90: #{tpu_custom_call.1} parent=87 // pred_check_branch
          %918 = sbr.rel (%p916) target = $region92
        $region91: #{tpu_custom_call.1} parent=87 // pred_region
          %s919 = sand.u32 %s205, 1
          %s920 = scalar_lea.sflag [#allocation4], %s919
          %s921 = sand.u32 %s205, 1
          %s922 = smul.addr %s921, 8
          %s923 = scalar_lea.vmem [#allocation14], %s922
          %925 = dma.done %s920, 128
        $region92: #{tpu_custom_call.1} parent=87 // pred_fallthru
          _
        // Predicated region
        $region93: #{tpu_custom_call.1} parent=87 // pred_check
          %p926 = pneg %p246
        $region94: #{tpu_custom_call.1} parent=87 // pred_check_branch
          %928 = sbr.rel (%p926) target = $region96
        $region95: #{tpu_custom_call.1} parent=87 // pred_region
          %s929 = sand.u32 %s231, 1
          %s930 = scalar_lea.sflag [#allocation16], %s929
          %s931 = sand.u32 %s231, 1
          %s932 = smul.addr %s931, 32
          %s933 = scalar_lea.vmem [#allocation15], %s932
          %935 = dma.done %s930, 512
        $region96: #{tpu_custom_call.1} parent=87 // pred_fallthru
          _
      $region88: #{tpu_custom_call.1} parent=5 // pred_fallthru
        _
    $region6: #{tpu_custom_call.1} parent=1 // loop_footer
      %s33 = sadd.s32 1, %s29
    $region7: #{tpu_custom_call.1} parent=1 // loop_footer_branch
      %28 = sbr.rel target = $region3
    $region8: #{tpu_custom_call.1} parent=1 // loop_exit
      _
    %936 = vsyncpa [#allocation3], 1
    %s937 = scalar_lea.sflag [#allocation3], 1
    %938 = vsyncpa %s937, 1
    %939 = vsyncpa [#allocation6], 1
    %s940 = scalar_lea.sflag [#allocation6], 1
    %941 = vsyncpa %s940, 1
    %942 = vsyncpa [#allocation9], 1
    %943 = vsyncpa [#allocation12], 1
    %944 = vsyncpa [#allocation4], 1
    %s945 = scalar_lea.sflag [#allocation4], 1
    %946 = vsyncpa %s945, 1
    %947 = vsyncpa [#allocation16], 1
    %s948 = scalar_lea.sflag [#allocation16], 1
    %949 = vsyncpa %s948, 1

</llo_original>
